<compile_context>
chip_gen: v7x
topology: tpu7x:2x2x1
jax: 0.10.0
libtpu: 0.0.40
codegen_flags: <defaults>
</compile_context>

<pallas_src>
import functools

import jax
import jax.numpy as jnp
from jax.experimental import pallas as pl
from jax.experimental.pallas import tpu as pltpu


# ---------------------------------------------------------------------------
# Kernels
# ---------------------------------------------------------------------------

def _layernorm_kernel(x_ref, a_ref, b_ref, o_ref, *, eps):
    x = x_ref[...].astype(jnp.float32)
    d = x.shape[-1]
    mean = jnp.mean(x, axis=-1, keepdims=True)
    diff = x - mean
    # torch.std defaults to the *unbiased* estimator (divide by N-1), and the
    # module adds eps to std (not to variance) — reproduce both exactly.
    var = jnp.sum(diff * diff, axis=-1, keepdims=True) * (1.0 / (d - 1))
    std = jnp.sqrt(var)
    inv = 1.0 / (std + eps)                     # one divide per row, not per element
    a = a_ref[...].astype(jnp.float32)
    b = b_ref[...].astype(jnp.float32)
    o_ref[...] = (a * (diff * inv) + b).astype(o_ref.dtype)


def _residual_add_kernel(x_ref, y_ref, o_ref):
    # dropout disabled (eval mode or p == 0): out = x + y
    o_ref[...] = x_ref[...] + y_ref[...]


def _residual_dropout_kernel(x_ref, y_ref, bits_ref, o_ref, *, threshold, scale):
    # out = x + dropout(y), inverted-scaling dropout; mask from streamed uint32 bits.
    keep = bits_ref[...] >= jnp.uint32(threshold)
    y = jnp.where(keep, y_ref[...].astype(jnp.float32) * jnp.float32(scale), 0.0)
    o_ref[...] = (x_ref[...].astype(jnp.float32) + y).astype(o_ref.dtype)


# ---------------------------------------------------------------------------
# pallas_call wrappers
# ---------------------------------------------------------------------------

# Row tile: multiple of 8 sublanes (f32); with the full hidden dim as the lane
# axis this gives multi-MB DMAs while the double-buffered footprint stays well
# under the default scoped VMEM even on v7x (64 MiB physical) for D up to ~8K.
_DEFAULT_BLOCK_ROWS = 128

_COMPILER_PARAMS = pltpu.CompilerParams(
    dimension_semantics=("parallel",),          # shard row tiles across TCs on v7x
    vmem_limit_bytes=48 * 1024 * 1024,
)


def _row_tiling(r, block_rows):
    tr = min(block_rows, r)
    if tr != r:
        tr = max(8, (tr // 8) * 8)              # keep sublane dim a multiple of 8
    return tr, pl.cdiv(r, tr)


def _layer_norm(x2d, a_2, b_2, eps, block_rows=_DEFAULT_BLOCK_ROWS):
    r, d = x2d.shape
    tr, grid = _row_tiling(r, block_rows)
    return pl.pallas_call(
        functools.partial(_layernorm_kernel, eps=eps),
        out_shape=jax.ShapeDtypeStruct((r, d), x2d.dtype),
        grid=(grid,),
        in_specs=[
            pl.BlockSpec((tr, d), lambda i: (i, 0)),
            pl.BlockSpec((1, d), lambda i: (0, 0)),
            pl.BlockSpec((1, d), lambda i: (0, 0)),
        ],
        out_specs=pl.BlockSpec((tr, d), lambda i: (i, 0)),
        compiler_params=_COMPILER_PARAMS,
    )(x2d, a_2.reshape(1, d), b_2.reshape(1, d))


def _residual_dropout(x2d, y2d, p, rng, training, block_rows=_DEFAULT_BLOCK_ROWS):
    r, d = x2d.shape
    tr, grid = _row_tiling(r, block_rows)
    row_spec = pl.BlockSpec((tr, d), lambda i: (i, 0))
    out_shape = jax.ShapeDtypeStruct((r, d), x2d.dtype)

    if (not training) or p == 0.0:
        return pl.pallas_call(
            _residual_add_kernel,
            out_shape=out_shape,
            grid=(grid,),
            in_specs=[row_spec, row_spec],
            out_specs=row_spec,
            input_output_aliases={0: 0},        # reuse x's HBM buffer for the output
            compiler_params=_COMPILER_PARAMS,
        )(x2d, y2d)

    # Per-call, per-element unique dropout bits (backend-portable PRNG).
    bits = jax.random.bits(rng, (r, d), dtype=jnp.uint32)
    threshold = min(int(p * 4294967296.0), 4294967295)   # P(drop) == p
    scale = 1.0 / (1.0 - p)
    return pl.pallas_call(
        functools.partial(_residual_dropout_kernel, threshold=threshold, scale=scale),
        out_shape=out_shape,
        grid=(grid,),
        in_specs=[row_spec, row_spec, row_spec],
        out_specs=row_spec,
        input_output_aliases={0: 0},
        compiler_params=_COMPILER_PARAMS,
    )(x2d, y2d, bits)


# ---------------------------------------------------------------------------
# Public entry point:  x + dropout(sublayer(layernorm(x)))
# ---------------------------------------------------------------------------

def sublayer_connection(x, a_2, b_2, sublayer, *, dropout=0.0, eps=1e-6,
                        rng=None, training=True):
    """Torch-exact SublayerConnection forward (unbiased std, eps added to std)."""
    b, s, d = x.shape
    x2d = x.reshape(b * s, d)
    ln = _layer_norm(x2d, a_2, b_2, eps).reshape(b, s, d)
    # TODO(synk): if the sublayer is known to end in a matmul, fuse LayerNorm
    # as its prologue and residual+dropout as its epilogue to cut HBM traffic
    # roughly in half; here the sublayer is an arbitrary user callable.
    y = sublayer(ln)
    if training and dropout > 0.0 and rng is None:
        rng = jax.random.PRNGKey(0)
    out2d = _residual_dropout(x2d, y.reshape(b * s, d), dropout, rng, training)
    return out2d.reshape(b, s, d)


if __name__ == "__main__":
    key = jax.random.PRNGKey(0)
    B, S, D = 2, 8, 32  # size == hidden == 32
    kx, kw, kd = jax.random.split(key, 3)
    x = jax.random.normal(kx, (B, S, D), dtype=jnp.float32)

    # Deterministic parameter init (matches module __init__):
    a_2 = jnp.ones((D,), jnp.float32)    # nn.Parameter(torch.ones(size))
    b_2 = jnp.zeros((D,), jnp.float32)   # nn.Parameter(torch.zeros(size))

    # Example sublayer: small deterministic linear (the module takes it as an argument).
    w = jax.random.normal(kw, (D, D), dtype=jnp.float32) * 0.02
    sublayer = lambda h: jnp.dot(h, w)

    # Training-mode run (dropout active).
    out_train = sublayer_connection(x, a_2, b_2, sublayer,
                                    dropout=0.1, eps=1e-6, rng=kd, training=True)
    jax.block_until_ready(out_train)

    # Eval-mode run, checked against a pure-JAX reference (dropout is identity).
    out_eval = sublayer_connection(x, a_2, b_2, sublayer,
                                   dropout=0.1, eps=1e-6, training=False)
    jax.block_until_ready(out_eval)
    mean = x.mean(-1, keepdims=True)
    std = jnp.sqrt(((x - mean) ** 2).sum(-1, keepdims=True) / (D - 1))
    ref = x + jnp.dot(a_2 * (x - mean) / (std + 1e-6) + b_2, w)
    assert jnp.allclose(out_eval, ref, atol=1e-5, rtol=1e-5), "mismatch vs reference"

    print("KERNEL_OK")
</pallas_src>

<mosaic_0001>
module attributes {stable_mosaic.version = 11 : i64} {
  func.func @_layernorm_kernel(%arg0: i32, %arg1: memref<16x32xf32, #tpu.memory_space<vmem>>, %arg2: memref<1x32xf32, #tpu.memory_space<vmem>>, %arg3: memref<1x32xf32, #tpu.memory_space<vmem>>, %arg4: memref<16x32xf32, #tpu.memory_space<vmem>>) attributes {dimension_semantics = [#tpu.dimension_semantics<parallel>], iteration_bounds = array<i64: 1>, scalar_prefetch = 0 : i64, scratch_operands = 0 : i64, tpu.core_type = #tpu.core_type<tc>, window_params = [{transform_indices = @transform_0, window_bounds = array<i64: 16, 32>}, {pipeline_mode = #tpu.pipeline_mode<synchronous>, transform_indices = @transform_1, window_bounds = array<i64: 1, 32>}, {pipeline_mode = #tpu.pipeline_mode<synchronous>, transform_indices = @transform_2, window_bounds = array<i64: 1, 32>}, {transform_indices = @transform_3, window_bounds = array<i64: 16, 32>}]} {
    %c0 = arith.constant 0 : index
    %c0_0 = arith.constant 0 : index
    %0 = vector.load %arg1[%c0, %c0_0] : memref<16x32xf32, #tpu.memory_space<vmem>>, vector<16x32xf32>
    %cst = arith.constant dense<0.000000e+00> : vector<16xf32>
    %1 = vector.multi_reduction <add>, %0, %cst [1] : vector<16x32xf32> to vector<16xf32>
    %2 = vector.shape_cast %1 : vector<16xf32> to vector<16x1xf32>
    %cst_1 = arith.constant 3.200000e+01 : f32
    %3 = vector.broadcast %cst_1 : f32 to vector<16x1xf32>
    %4 = arith.divf %2, %3 : vector<16x1xf32>
    %5 = vector.broadcast %4 : vector<16x1xf32> to vector<16x32xf32>
    %6 = arith.subf %0, %5 : vector<16x32xf32>
    %7 = arith.mulf %6, %6 : vector<16x32xf32>
    %cst_2 = arith.constant dense<0.000000e+00> : vector<16xf32>
    %8 = vector.multi_reduction <add>, %7, %cst_2 [1] : vector<16x32xf32> to vector<16xf32>
    %9 = vector.shape_cast %8 : vector<16xf32> to vector<16x1xf32>
    %cst_3 = arith.constant 0.0322580636 : f32
    %10 = vector.broadcast %cst_3 : f32 to vector<16x1xf32>
    %11 = arith.mulf %9, %10 : vector<16x1xf32>
    %12 = math.sqrt %11 : vector<16x1xf32>
    %cst_4 = arith.constant 9.99999997E-7 : f32
    %13 = vector.broadcast %cst_4 : f32 to vector<16x1xf32>
    %14 = arith.addf %12, %13 : vector<16x1xf32>
    %cst_5 = arith.constant 1.000000e+00 : f32
    %15 = vector.broadcast %cst_5 : f32 to vector<16x1xf32>
    %16 = arith.divf %15, %14 : vector<16x1xf32>
    %c0_6 = arith.constant 0 : index
    %c0_7 = arith.constant 0 : index
    %17 = vector.load %arg2[%c0_6, %c0_7] : memref<1x32xf32, #tpu.memory_space<vmem>>, vector<1x32xf32>
    %c0_8 = arith.constant 0 : index
    %c0_9 = arith.constant 0 : index
    %18 = vector.load %arg3[%c0_8, %c0_9] : memref<1x32xf32, #tpu.memory_space<vmem>>, vector<1x32xf32>
    %19 = vector.broadcast %16 : vector<16x1xf32> to vector<16x32xf32>
    %20 = arith.mulf %6, %19 : vector<16x32xf32>
    %21 = vector.broadcast %17 : vector<1x32xf32> to vector<16x32xf32>
    %22 = arith.mulf %21, %20 : vector<16x32xf32>
    %23 = vector.broadcast %18 : vector<1x32xf32> to vector<16x32xf32>
    %24 = arith.addf %22, %23 : vector<16x32xf32>
    %c0_10 = arith.constant 0 : index
    %c0_11 = arith.constant 0 : index
    %25 = vector.load %arg4[%c0_10, %c0_11] : memref<16x32xf32, #tpu.memory_space<vmem>>, vector<16x32xf32>
    tpu.vector_store %arg4[%c0_10, %c0_11], %24 {strides = array<i32>} : memref<16x32xf32, #tpu.memory_space<vmem>>, vector<16x32xf32>,
    return
  }
  func.func @transform_0(%arg0: i32) -> (i32, i32) {
    %c0_i32 = arith.constant 0 : i32
    %c0_i32_0 = arith.constant 0 : i32
    return %arg0, %c0_i32 : i32, i32
  }
  func.func @transform_1(%arg0: i32) -> (i32, i32) {
    %c0_i32 = arith.constant 0 : i32
    %c0_i32_0 = arith.constant 0 : i32
    %c0_i32_1 = arith.constant 0 : i32
    return %c0_i32, %c0_i32_0 : i32, i32
  }
  func.func @transform_2(%arg0: i32) -> (i32, i32) {
    %c0_i32 = arith.constant 0 : i32
    %c0_i32_0 = arith.constant 0 : i32
    %c0_i32_1 = arith.constant 0 : i32
    return %c0_i32, %c0_i32_0 : i32, i32
  }
  func.func @transform_3(%arg0: i32) -> (i32, i32) {
    %c0_i32 = arith.constant 0 : i32
    %c0_i32_0 = arith.constant 0 : i32
    return %arg0, %c0_i32 : i32, i32
  }
}

</mosaic_0001>

<llo_original>
// kernel: tpu_custom_call.1
$region0: #{tpu_custom_call.1}
  #allocation0 [shape = 'u32[]', space=smem, size = 0x4, offset = 0x4, fixed_abs, tag = 'smem constant byte address 0x4 - core index']
  #allocation1 [shape = 'u32[144,128]{1,0:T(1,128)}', space=vmem, size = 0x12000, scoped, tag = 'internal scratch']
  %s0 = inlined_call_operand.hbm [shape: f32[16,32], index: 0, kind: input, shape index: {}]
  %s1 = inlined_call_operand.vmem [shape: f32[1,32], index: 1, kind: input, shape index: {}]
  %s2 = inlined_call_operand.vmem [shape: f32[1,32], index: 2, kind: input, shape index: {}]
  %s3 = inlined_call_operand.hbm [shape: f32[16,32], index: 3, kind: output, shape index: {}]
  %s4 = sld [smem:[#allocation0]]
  $region26: #{tpu_custom_call.1} parent=0
    _
  %s6 = ssub.s32 1, %s4
  %s7 = scalar_select 0, %s6, %s4
  $region1: #{tpu_custom_call.1} parent=0
    #allocation2 [shape = 'u8[8192]{0}', space=vmem, size = 0x2000, scoped, tag = 'input window, operand 0, single buffered']
    #allocation3 [shape = 's32[1]{0}', space=sflag, size = 0x4, scoped, tag = 'scoped memory for tpu_custom_call.1']
    #allocation4 [shape = 's32[1]{0}', space=sflag, size = 0x4, scoped, tag = 'scoped memory for tpu_custom_call.1']
    #allocation5 [shape = 'u8[8192]{0}', space=vmem, size = 0x2000, scoped, tag = 'output window, operand 0, single buffered']
    %8 = vsyncpa [#allocation3], 0
    %9 = vsyncpa [#allocation4], 0
    // Predicated region
    $region2: #{tpu_custom_call.1} parent=1 // pred_check
      _
    $region3: #{tpu_custom_call.1} parent=1 // pred_check_branch
      %11 = sbr.rel (0) target = $region5
    $region4: #{tpu_custom_call.1} parent=1 // pred_region
      %s13 = ssub.s32 256, 256
      %14 = vsyncadd [#allocation3], %s13
      %s15 = sshll.u32 [#allocation2], 4
      %s16 = int_to_ptr.vmem [resolvable:$true] %s15
      %21 = dma.hbm_to_vmem [thread:$0]  %s0, 256, %s16, [#allocation3], 128, 128, 8
    $region5: #{tpu_custom_call.1} parent=1 // pred_fallthru
      _
    // Predicated region
    $region6: #{tpu_custom_call.1} parent=1 // pred_check
      _
    $region7: #{tpu_custom_call.1} parent=1 // pred_check_branch
      %23 = sbr.rel (0) target = $region9
    $region8: #{tpu_custom_call.1} parent=1 // pred_region
      _
    $region9: #{tpu_custom_call.1} parent=1 // pred_fallthru
      _
    // Predicated region
    $region10: #{tpu_custom_call.1} parent=1 // pred_check
      _
    $region11: #{tpu_custom_call.1} parent=1 // pred_check_branch
      %25 = sbr.rel (0) target = $region13
    $region12: #{tpu_custom_call.1} parent=1 // pred_region
      _
    $region13: #{tpu_custom_call.1} parent=1 // pred_fallthru
      _
    // Predicated region
    $region14: #{tpu_custom_call.1} parent=1 // pred_check
      _
    $region15: #{tpu_custom_call.1} parent=1 // pred_check_branch
      %27 = sbr.rel (0) target = $region17
    $region16: #{tpu_custom_call.1} parent=1 // pred_region
      %28 = dma.done [#allocation3], 256
    $region17: #{tpu_custom_call.1} parent=1 // pred_fallthru
      _
    %v29 = vld [vmem:[#allocation2] sm:$0xff]
    %v30 = vld [vmem:[#allocation2 + $0x8] sm:$0xff]
    %vm31 = vcmask 261120
    %v32 = vsel %vm31, %v29, 0.0
    %33 = vadd.xlane.f32.xlu0 %v32
    %v34 = vpop.xlane.xlu0 %33
    %v35 = vsel %vm31, %v30, 0.0
    %36 = vadd.xlane.f32.xlu0 %v35
    %v37 = vpop.xlane.xlu0 %36
    %v38 = vrcp.pop 32.0
    %v39 = vmul.f32 %v34, %v38
    %v40 = vmul.f32 %v37, %v38
    %v41 = vsub.f32 %v29, %v39
    %v42 = vsub.f32 %v30, %v40
    %v43 = vmul.f32 %v41, %v41
    %v44 = vmul.f32 %v42, %v42
    %v45 = vsel %vm31, %v43, 0.0
    %46 = vadd.xlane.f32.xlu0 %v45
    %v47 = vpop.xlane.xlu0 %46
    %v48 = vsel %vm31, %v44, 0.0
    %49 = vadd.xlane.f32.xlu0 %v48
    %v50 = vpop.xlane.xlu0 %49
    %v51 = vmul.f32 %v47, 0.032258064
    %v52 = vmul.f32 %v50, 0.032258064
    %v53 = vrsqrt.pop %v51
    %v54 = vmul.f32 %v51, %v53
    %vm55 = vcmp.eq.f32.partialorder %v51, inf
    %v56 = vsel %vm55, %v51, %v54
    %vm57 = vcmp.eq.f32.partialorder %v51, 0.0
    %v58 = vand.u32 %v51, 2147483648
    %v59 = vsel %vm57, %v58, %v56
    %v60 = vrsqrt.pop %v52
    %v61 = vmul.f32 %v52, %v60
    %vm62 = vcmp.eq.f32.partialorder %v52, inf
    %v63 = vsel %vm62, %v52, %v61
    %vm64 = vcmp.eq.f32.partialorder %v52, 0.0
    %v65 = vand.u32 %v52, 2147483648
    %v66 = vsel %vm64, %v65, %v63
    %v67 = vadd.f32 %v59, 1e-06
    %v68 = vadd.f32 %v66, 1e-06
    %v69 = vrcp.pop %v67
    %v70 = vmul.f32 1.0, %v69
    %v71 = vrcp.pop %v68
    %v72 = vmul.f32 1.0, %v71
    %v73 = vld [vmem:[%s1] sm:$0x1]
    %v74 = vld [vmem:[%s2] sm:$0x1]
    %v75 = vmul.f32 %v41, %v70
    %v76 = vmul.f32 %v42, %v72
    %v78 = vlaneseq
    %v79 = vshrl.u32 %v78, 7
    %v80 = vsub.s32 0, %v79
    %v81 = vrot.slane %v73, %v80
    %v83 = vmul.f32 %v81, %v75
    %v84 = vmul.f32 %v81, %v76
    %v86 = vlaneseq
    %v87 = vshrl.u32 %v86, 7
    %v88 = vsub.s32 0, %v87
    %v89 = vrot.slane %v74, %v88
    %v91 = vadd.f32 %v83, %v89
    %v92 = vadd.f32 %v84, %v89
    %93 = vst.msk [vmem:[#allocation5] sm:$0xff] %vm31, %v91
    %94 = vst.msk [vmem:[#allocation5 + $0x8] sm:$0xff] %vm31, %v92
    // Predicated region
    $region18: #{tpu_custom_call.1} parent=1 // pred_check
      _
    $region19: #{tpu_custom_call.1} parent=1 // pred_check_branch
      %96 = sbr.rel (0) target = $region21
    $region20: #{tpu_custom_call.1} parent=1 // pred_region
      %s98 = ssub.s32 256, 256
      %99 = vsyncadd [#allocation4], %s98
      %s100 = sshll.u32 [#allocation5], 4
      %s101 = int_to_ptr.vmem [resolvable:$true] %s100
      %106 = dma.vmem_to_hbm [thread:$0]  %s101, 256, %s3, [#allocation4], 128, 128, 8
    $region21: #{tpu_custom_call.1} parent=1 // pred_fallthru
      _
    // Predicated region
    $region22: #{tpu_custom_call.1} parent=1 // pred_check
      _
    $region23: #{tpu_custom_call.1} parent=1 // pred_check_branch
      %108 = sbr.rel (0) target = $region25
    $region24: #{tpu_custom_call.1} parent=1 // pred_region
      %109 = dma.done [#allocation4], 256
    $region25: #{tpu_custom_call.1} parent=1 // pred_fallthru
      _
    %110 = vsyncpa [#allocation3], 1
    %111 = vsyncpa [#allocation4], 1

</llo_original>
